<compile_context>
chip_gen: v6e
topology: v6e:2x2x1
jax: 0.10.0
libtpu: 0.0.40
codegen_flags: <defaults>
</compile_context>

<pallas_src>
import jax
import jax.numpy as jnp
from jax.experimental import pallas as pl
from jax.experimental.pallas import tpu as pltpu


def _hsigmoid_kernel(x_ref, o_ref):
    x = x_ref[...]
    # relu6(x + 3.0) * (1/3): constant multiply instead of divide (pure VPU).
    o_ref[...] = (jnp.clip(x + 3.0, 0.0, 6.0) * (1.0 / 3.0)).astype(o_ref.dtype)


def _ceil_to(a, b):
    return -(-a // b) * b


@jax.jit
def hsigmoid(x):
    """Elementwise Hsigmoid: relu6(x + 3) / 3. Any shape, float dtype in == out."""
    orig_shape = x.shape
    dtype = x.dtype
    if not jnp.issubdtype(dtype, jnp.floating):
        # Integer inputs would silently truncate on the final cast; reject.
        raise TypeError(f"hsigmoid expects a floating dtype, got {dtype}")
    total = x.size
    if total == 0:
        return x

    itemsize = jnp.dtype(dtype).itemsize
    pack = max(1, 4 // itemsize)          # 1 for f32, 2 for bf16/f16
    sublane = 8 * pack                    # sublane multiple for this dtype
    max_block_rows = 1024 * pack          # ~2 MiB blocks for any float dtype

    # Adaptive lane width: avoid the pad/slice fallback whenever possible.
    for lanes in (512, 256, 128):
        if total % lanes == 0:
            padded_total = total
            break
    else:
        lanes = 128
        padded_total = _ceil_to(total, lanes)   # rare: pad at most 127 elems

    rows = padded_total // lanes

    # Tile selection:
    #  * tiny inputs (rows <= sublane): one full-dim block (legal per the
    #    (8,128) rule since the block equals the array dim),
    #  * otherwise split into >= 2 blocks so v7x's two TCs both get work,
    #    capped at ~2 MiB per block (v5e-safe with double-buffered in+out).
    if rows <= sublane:
        tile_rows = rows
    else:
        half = _ceil_to(-(-rows // 2), sublane)   # ceil(rows/2) -> sublane mult
        tile_rows = min(max_block_rows, half)

    num_blocks = -(-rows // tile_rows)            # ragged last block is masked

    x_flat = jnp.ravel(x)
    if padded_total != total:
        x_flat = jnp.pad(x_flat, (0, padded_total - total))
    x2d = x_flat.reshape(rows, lanes)

    # Triple-buffer the input on short grids to hide the pipeline ramp.
    if 2 <= num_blocks <= 4:
        in_spec = pl.BlockSpec((tile_rows, lanes), lambda i: (i, 0),
                               pipeline_mode=pl.Buffered(3))
    else:
        in_spec = pl.BlockSpec((tile_rows, lanes), lambda i: (i, 0))

    out2d = pl.pallas_call(
        _hsigmoid_kernel,
        out_shape=jax.ShapeDtypeStruct((rows, lanes), dtype),
        grid_spec=pltpu.PrefetchScalarGridSpec(
            num_scalar_prefetch=0,
            grid=(num_blocks,),
            in_specs=[in_spec],
            out_specs=pl.BlockSpec((tile_rows, lanes), lambda i: (i, 0)),
        ),
        # Output slab has the input slab's shape/dtype: donate it so XLA can
        # reuse the buffer when x is dead after this op.
        input_output_aliases={0: 0},
        compiler_params=pltpu.CompilerParams(
            dimension_semantics=("parallel",),
        ),
    )(x2d)

    out_flat = out2d.reshape(padded_total)
    if padded_total != total:
        out_flat = out_flat[:total]
    return out_flat.reshape(orig_shape)


def _reference(x):
    return jnp.clip(x + 3.0, 0.0, 6.0) / 3.0


if __name__ == "__main__":
    key = jax.random.PRNGKey(0)

    # NCHW, small shape consistent with the module's conv-style usage.
    x = jax.random.normal(key, (2, 4, 16, 16), dtype=jnp.float32) * 4.0
    y = jax.block_until_ready(hsigmoid(x))
    y_ref = _reference(x)
    assert y.shape == x.shape and y.dtype == x.dtype
    assert jnp.max(jnp.abs(y - y_ref)) < 1e-5

    # Ragged (not a multiple of 128): exercises the rare pad fallback path.
    x2 = jax.random.normal(jax.random.PRNGKey(1), (3, 5, 7, 9), dtype=jnp.float32) * 4.0
    y2 = jax.block_until_ready(hsigmoid(x2))
    assert y2.shape == x2.shape and y2.dtype == x2.dtype
    assert jnp.max(jnp.abs(y2 - _reference(x2))) < 1e-5

    # Larger aligned shape: exercises multi-block (>=2 grid steps), Buffered(3),
    # and the input/output aliasing path.
    x3 = jax.random.normal(jax.random.PRNGKey(2), (2, 16, 64, 64), dtype=jnp.float32) * 4.0
    y3 = jax.block_until_ready(hsigmoid(x3))
    assert y3.shape == x3.shape and y3.dtype == x3.dtype
    assert jnp.max(jnp.abs(y3 - _reference(x3))) < 1e-5

    # bf16 path (dtype-scaled sublane / tile size).
    x4 = jax.random.normal(jax.random.PRNGKey(3), (2, 4, 16, 16), dtype=jnp.bfloat16) * 4.0
    y4 = jax.block_until_ready(hsigmoid(x4))
    assert y4.shape == x4.shape and y4.dtype == jnp.bfloat16
    err = jnp.max(jnp.abs(y4.astype(jnp.float32) - _reference(x4.astype(jnp.float32))))
    assert err < 5e-2

    print("KERNEL_OK")
</pallas_src>

<mosaic_0001>
module attributes {stable_mosaic.version = 11 : i64} {
  func.func @_hsigmoid_kernel(%arg0: i32, %arg1: memref<4x512xf32, #tpu.memory_space<vmem>>, %arg2: memref<4x512xf32, #tpu.memory_space<vmem>>) attributes {dimension_semantics = [#tpu.dimension_semantics<parallel>], iteration_bounds = array<i64: 1>, scalar_prefetch = 0 : i64, scratch_operands = 0 : i64, tpu.core_type = #tpu.core_type<tc>, window_params = [{transform_indices = @transform_0, window_bounds = array<i64: 4, 512>}, {transform_indices = @transform_1, window_bounds = array<i64: 4, 512>}]} {
    %c0 = arith.constant 0 : index
    %c0_0 = arith.constant 0 : index
    %0 = vector.load %arg1[%c0, %c0_0] : memref<4x512xf32, #tpu.memory_space<vmem>>, vector<4x512xf32>
    %cst = arith.constant 3.000000e+00 : f32
    %1 = vector.broadcast %cst : f32 to vector<4x512xf32>
    %2 = arith.addf %0, %1 : vector<4x512xf32>
    %cst_1 = arith.constant 0.000000e+00 : f32
    %cst_2 = arith.constant 6.000000e+00 : f32
    %3 = vector.broadcast %cst_1 : f32 to vector<4x512xf32>
    %4 = arith.maximumf %3, %2 : vector<4x512xf32>
    %5 = vector.broadcast %cst_2 : f32 to vector<4x512xf32>
    %6 = arith.minimumf %5, %4 : vector<4x512xf32>
    %cst_3 = arith.constant 0.333333343 : f32
    %7 = vector.broadcast %cst_3 : f32 to vector<4x512xf32>
    %8 = arith.mulf %6, %7 : vector<4x512xf32>
    %c0_4 = arith.constant 0 : index
    %c0_5 = arith.constant 0 : index
    %9 = vector.load %arg2[%c0_4, %c0_5] : memref<4x512xf32, #tpu.memory_space<vmem>>, vector<4x512xf32>
    tpu.vector_store %arg2[%c0_4, %c0_5], %8 {strides = array<i32>} : memref<4x512xf32, #tpu.memory_space<vmem>>, vector<4x512xf32>,
    return
  }
  func.func @transform_0(%arg0: i32) -> (i32, i32) {
    %c0_i32 = arith.constant 0 : i32
    %c0_i32_0 = arith.constant 0 : i32
    return %arg0, %c0_i32 : i32, i32
  }
  func.func @transform_1(%arg0: i32) -> (i32, i32) {
    %c0_i32 = arith.constant 0 : i32
    %c0_i32_0 = arith.constant 0 : i32
    return %arg0, %c0_i32 : i32, i32
  }
}

</mosaic_0001>

<llo_original>
// kernel: hsigmoid.1
$region0: #{hsigmoid.1}
  #allocation0 [shape = 'u32[]', space=smem, size = 0x4, offset = 0x4, fixed_abs, tag = 'smem constant byte address 0x4 - core index']
  #allocation1 [shape = 'u32[144,128]{1,0:T(1,128)}', space=vmem, size = 0x12000, scoped, tag = 'internal scratch']
  %s0 = inlined_call_operand.vmem [shape: f32[4,512], index: 0, kind: input, shape index: {}, may-alias: {0,1}]
  %s1 = inlined_call_operand.vmem [shape: f32[4,512], index: 1, kind: output, shape index: {}, may-alias: {0,1}]
  %s2 = sld [smem:[#allocation0]]
  $region14: #{hsigmoid.1} parent=0
    _
  %s4 = ssub.s32 1, %s2
  %s5 = scalar_select 0, %s4, %s2
  // Predicated region
  $region2: #{hsigmoid.1} parent=0 // pred_check
    _
  $region3: #{hsigmoid.1} parent=0 // pred_check_branch
    %7 = sbr.rel (0) target = $region5
  $region4: #{hsigmoid.1} parent=0 // pred_region
    _
  $region5: #{hsigmoid.1} parent=0 // pred_fallthru
    _
  %v8 = vld [vmem:[%s0] sm:$0xff]
  %v9 = vld [vmem:[%s0 + $0x8] sm:$0xff]
  %v10 = vadd.f32 %v8, 3.0
  %v11 = vadd.f32 %v9, 3.0
  %v12 = vmax.f32 %v10, 0.0
  %v13 = vmax.f32 %v11, 0.0
  %v14 = vmin.f32 %v12, 6.0
  %v15 = vmin.f32 %v13, 6.0
  %v16 = vmul.f32 %v14, 0.33333334
  %v17 = vmul.f32 %v15, 0.33333334
  %18 = vst [vmem:[%s1] sm:$0xff] %v16
  %19 = vst [vmem:[%s1 + $0x8] sm:$0xff] %v17
  // Predicated region
  $region6: #{hsigmoid.1} parent=0 // pred_check
    _
  $region7: #{hsigmoid.1} parent=0 // pred_check_branch
    %21 = sbr.rel (0) target = $region9
  $region8: #{hsigmoid.1} parent=0 // pred_region
    _
  $region9: #{hsigmoid.1} parent=0 // pred_fallthru
    _
  // Predicated region
  $region10: #{hsigmoid.1} parent=0 // pred_check
    _
  $region11: #{hsigmoid.1} parent=0 // pred_check_branch
    %23 = sbr.rel (0) target = $region13
  $region12: #{hsigmoid.1} parent=0 // pred_region
    _
  $region13: #{hsigmoid.1} parent=0 // pred_fallthru
    _

</llo_original>
